<compile_context>
chip_gen: v5e
topology: v5e:2x2
jax: 0.10.0
libtpu: 0.0.40
codegen_flags: <defaults>
</compile_context>

<pallas_src>
import functools

import jax
import jax.numpy as jnp
from jax.experimental import pallas as pl
from jax.experimental.pallas import tpu as pltpu


def _round_up(x, m):
    return ((x + m - 1) // m) * m


def _pad2d(x, rows, cols):
    r, c = x.shape
    return jnp.pad(x, ((0, rows - r), (0, cols - c)))


# ----------------------------------------------------------------------------
# Pallas kernel: one SageGCN layer on a tile of source nodes.
# ----------------------------------------------------------------------------
def _sage_gcn_kernel(src_ref, nbr_ref, w_ref, out_ref, *, num_neighbors, apply_relu):
    """num_neighbors is None when the mean is folded into the MXU weight."""
    src = src_ref[...]                                   # (tile_n, D)  bf16
    d = src.shape[1]
    w_rows = w_ref.shape[0]

    if num_neighbors is None:
        # Mean folded into the weight: bottom block of w is tile(W_agg / K, K).
        x2 = nbr_ref[...]                                # (tile_n, K*D) bf16
    else:
        # Neighbor mean: K lane-aligned D-wide VPU adds, f32 accumulation.
        nbr = nbr_ref[...]                               # (tile_n, K*D) bf16
        aggr = nbr[:, 0:d].astype(jnp.float32)
        for k in range(1, num_neighbors):
            aggr = aggr + nbr[:, k * d:(k + 1) * d].astype(jnp.float32)
        x2 = (aggr * (1.0 / num_neighbors)).astype(src.dtype)

    # Two MXU dots against the resident fused weight (no concat copy).
    h = jnp.dot(src, w_ref[pl.ds(0, d), :], preferred_element_type=jnp.float32)
    h = h + jnp.dot(x2, w_ref[pl.ds(d, w_rows - d), :],
                    preferred_element_type=jnp.float32)

    if apply_relu:
        h = jnp.maximum(h, 0.0)

    out_ref[...] = h.astype(out_ref.dtype)


# ----------------------------------------------------------------------------
# VMEM-aware tile sizing.
# ----------------------------------------------------------------------------
def _vmem_capacity_bytes():
    try:
        info = pltpu.get_tpu_info()
        cap = getattr(info, "vmem_capacity_bytes", None)
        if cap:
            return int(cap)
    except Exception:
        pass
    return 128 * 1024 * 1024


def _pick_tile_n(n_rows, d_pad, kd, h_pad, out_itemsize, w_rows, *, max_tile=512):
    cap = _vmem_capacity_bytes()
    # <= 32 MiB on v7x (64 MiB VMEM), 64 MiB on v5e/v6e (128 MiB VMEM).
    vmem_limit = min(64 * 1024 * 1024, cap // 2)

    # Resident fused weight (constant index map) + safety margin come off the top.
    w_bytes = w_rows * h_pad * 2
    budget = max(vmem_limit - 2 * w_bytes - (2 << 20), 1 << 20)

    # Double-buffered per-step tiles: bf16 src + bf16 nbr + out.
    bytes_per_row = 2 * (2 * d_pad + 2 * kd + out_itemsize * h_pad)
    t = budget // max(bytes_per_row, 1)
    t = max(16, min(max_tile, (t // 16) * 16))          # bf16-native (16,128) rows

    # Keep >= 2 grid steps for moderate N so both v7x TensorCores get work.
    if n_rows > 512:
        t = min(t, _round_up(-(-n_rows // 2), 16))
    t = min(t, _round_up(n_rows, 16))
    return int(t), int(vmem_limit)


# ----------------------------------------------------------------------------
# One SageGCN layer (wrapper around pallas_call).
# ----------------------------------------------------------------------------
def sage_gcn(src, nbr2d, w_cat, *, num_neighbors, apply_relu, out_dtype,
             max_tile_n=512):
    """src: (N, D_pad) bf16; nbr2d: (N, K*D_pad) bf16;
    w_cat: (D_pad + bot_rows, H_pad) bf16 fused weight. Returns (N, H_pad) out_dtype."""
    n, d = src.shape
    kd = nbr2d.shape[1]
    w_rows, h_dim = w_cat.shape
    out_itemsize = jnp.dtype(out_dtype).itemsize

    tile_n, vmem_limit = _pick_tile_n(n, d, kd, h_dim, out_itemsize, w_rows,
                                      max_tile=max_tile_n)
    num_tiles = pl.cdiv(n, tile_n)
    n_pad = num_tiles * tile_n
    if n_pad != n:
        src = jnp.pad(src, ((0, n_pad - n), (0, 0)))
        nbr2d = jnp.pad(nbr2d, ((0, n_pad - n), (0, 0)))

    kernel = functools.partial(
        _sage_gcn_kernel, num_neighbors=num_neighbors, apply_relu=apply_relu)

    out = pl.pallas_call(
        kernel,
        out_shape=jax.ShapeDtypeStruct((n_pad, h_dim), out_dtype),
        grid=(num_tiles,),
        in_specs=[
            pl.BlockSpec((tile_n, d), lambda i: (i, 0)),       # src tile (lane-dense)
            pl.BlockSpec((tile_n, kd), lambda i: (i, 0)),      # neighbors, 2-D lane-dense
            pl.BlockSpec((w_rows, h_dim), lambda i: (0, 0)),   # fused weight (resident)
        ],
        out_specs=pl.BlockSpec((tile_n, h_dim), lambda i: (i, 0)),
        compiler_params=pltpu.CompilerParams(
            dimension_semantics=("parallel",),
            vmem_limit_bytes=vmem_limit,
        ),
    )(src, nbr2d, w_cat)
    return out[:n]


# ----------------------------------------------------------------------------
# Weight preparation (hoisted out of the per-hop hot path).
# ----------------------------------------------------------------------------
def _should_fold(k, d_pad, h_pad, *, max_k=16, max_bytes=4 << 20):
    """Fold the neighbor mean into the MXU weight only while it's cheap."""
    return (k <= max_k) and ((1 + k) * d_pad * h_pad * 2 <= max_bytes)


def _prepare_hop_weight(w_self, w_agg, k, fold):
    din, dout = w_self.shape
    d_pad, h_pad = _round_up(din, 128), _round_up(dout, 128)
    w_top = _pad2d(w_self, d_pad, h_pad)
    if fold:
        w_bot = jnp.tile(_pad2d(w_agg / float(k), d_pad, h_pad), (k, 1))
    else:
        w_bot = _pad2d(w_agg, d_pad, h_pad)
    return jnp.concatenate([w_top, w_bot], axis=0).astype(jnp.bfloat16)


def _prepare_all_weights(params, num_neighbors_list):
    """Per layer, a dict {K: (fused bf16 weight, fold_flag)} covering every hop."""
    num_layers = len(num_neighbors_list)
    prepared = []
    for l in range(num_layers):
        w_self, w_agg = params[l]
        din, dout = w_self.shape
        d_pad, h_pad = _round_up(din, 128), _round_up(dout, 128)
        per_k = {}
        for hop in range(num_layers - l):
            k = num_neighbors_list[hop]
            if k in per_k:
                continue
            fold = _should_fold(k, d_pad, h_pad)
            per_k[k] = (_prepare_hop_weight(w_self, w_agg, k, fold), fold)
        prepared.append(per_k)
    return prepared


# ----------------------------------------------------------------------------
# GraphSage forward (plain-JAX glue around the Pallas kernel).
# ----------------------------------------------------------------------------
def graphsage_forward(node_features_list, params, num_neighbors_list):
    num_layers = len(num_neighbors_list)
    input_dim = node_features_list[0].shape[1]
    d_pad0 = _round_up(input_dim, 128)

    # Lane-pad feature dim to a multiple of 128; activations travel in bf16.
    hidden = [
        jnp.pad(x, ((0, 0), (0, d_pad0 - input_dim))).astype(jnp.bfloat16)
        for x in node_features_list
    ]
    weights = _prepare_all_weights(params, num_neighbors_list)

    for l in range(num_layers):
        apply_relu = l < num_layers - 1          # last SageGCN has activation=None
        out_dtype = jnp.bfloat16 if apply_relu else jnp.float32
        next_hidden = []
        for hop in range(num_layers - l):
            src = hidden[hop]                    # (n_src, d_pad) bf16
            n_src = src.shape[0]
            k = num_neighbors_list[hop]
            d_p = src.shape[1]
            nbr2d = hidden[hop + 1].reshape(n_src, k * d_p)
            w_arr, fold = weights[l][k]
            h = sage_gcn(src, nbr2d, w_arr,
                         num_neighbors=None if fold else k,
                         apply_relu=apply_relu, out_dtype=out_dtype)
            next_hidden.append(h)                # already bf16 for hidden layers
        hidden = next_hidden

    out_dim = params[-1][0].shape[1]
    return hidden[0][:, :out_dim]


# ----------------------------------------------------------------------------
# Pure-JAX references for correctness checks.
# ----------------------------------------------------------------------------
def graphsage_reference_f32(node_features_list, params, num_neighbors_list):
    """Exact f32 math, mirroring the PyTorch module."""
    num_layers = len(num_neighbors_list)
    hidden = list(node_features_list)
    for l in range(num_layers):
        w_self, w_agg = params[l]
        apply_relu = l < num_layers - 1
        next_hidden = []
        for hop in range(num_layers - l):
            src = hidden[hop]
            n_src = src.shape[0]
            nbr = hidden[hop + 1].reshape(n_src, num_neighbors_list[hop], -1)
            h = src @ w_self + jnp.mean(nbr, axis=1) @ w_agg
            if apply_relu:
                h = jax.nn.relu(h)
            next_hidden.append(h)
        hidden = next_hidden
    return hidden[0]


def graphsage_reference_bf16(node_features_list, params, num_neighbors_list):
    """Mirrors the kernel's bf16-operand / f32-accumulation math exactly."""
    num_layers = len(num_neighbors_list)
    input_dim = node_features_list[0].shape[1]
    d_pad0 = _round_up(input_dim, 128)
    hidden = [
        jnp.pad(x, ((0, 0), (0, d_pad0 - input_dim))).astype(jnp.bfloat16)
        for x in node_features_list
    ]
    weights = _prepare_all_weights(params, num_neighbors_list)
    for l in range(num_layers):
        apply_relu = l < num_layers - 1
        next_hidden = []
        for hop in range(num_layers - l):
            src = hidden[hop]
            n_src = src.shape[0]
            k = num_neighbors_list[hop]
            d_p = src.shape[1]
            nbr2d = hidden[hop + 1].reshape(n_src, k * d_p)
            w_arr, fold = weights[l][k]
            if fold:
                x2 = nbr2d
            else:
                nbr = nbr2d.reshape(n_src, k, d_p)
                x2 = (jnp.sum(nbr.astype(jnp.float32), axis=1) / k).astype(jnp.bfloat16)
            h = (jnp.dot(src, w_arr[:d_p], preferred_element_type=jnp.float32)
                 + jnp.dot(x2, w_arr[d_p:], preferred_element_type=jnp.float32))
            if apply_relu:
                h = jnp.maximum(h, 0.0).astype(jnp.bfloat16)
            next_hidden.append(h)
        hidden = next_hidden
    out_dim = params[-1][0].shape[1]
    return hidden[0][:, :out_dim]


# ----------------------------------------------------------------------------
# Deterministic parameter init (kaiming-uniform style, as in the module).
# ----------------------------------------------------------------------------
def kaiming_uniform(key, shape):
    fan_in = shape[0]
    bound = jnp.sqrt(6.0 / fan_in)
    return jax.random.uniform(key, shape, jnp.float32, -bound, bound)


if __name__ == "__main__":
    key = jax.random.PRNGKey(0)

    # Small, TPU-friendly configuration.
    input_dim = 128
    hidden_dim = [64, 32]            # len(hidden_dim) == num GCN layers
    num_neighbors_list = [4, 2]
    num_src = 8                      # number of target nodes

    # Node feature lists (hop 0: sources, hop 1: their neighbors, hop 2: 2-hop).
    n0 = num_src
    n1 = n0 * num_neighbors_list[0]
    n2 = n1 * num_neighbors_list[1]
    k_f0, k_f1, k_f2, key = jax.random.split(key, 4)
    node_features_list = [
        jax.random.normal(k_f0, (n0, input_dim), jnp.float32),
        jax.random.normal(k_f1, (n1, input_dim), jnp.float32),
        jax.random.normal(k_f2, (n2, input_dim), jnp.float32),
    ]

    # Per-layer weights: (W_self, W_aggregator), shapes (in_dim, out_dim).
    dims = [input_dim] + hidden_dim
    params = []
    for l in range(len(hidden_dim)):
        k_s, k_a, key = jax.random.split(key, 3)
        params.append((
            kaiming_uniform(k_s, (dims[l], dims[l + 1])),
            kaiming_uniform(k_a, (dims[l], dims[l + 1])),
        ))

    out = graphsage_forward(node_features_list, params, num_neighbors_list)
    out = jax.block_until_ready(out)
    assert out.shape == (num_src, hidden_dim[-1]), out.shape

    # Tight check vs. a JAX reference mirroring the kernel's bf16/f32 math.
    ref_bf16 = graphsage_reference_bf16(node_features_list, params, num_neighbors_list)
    assert jnp.allclose(out, ref_bf16, atol=1e-2, rtol=1e-2), "mismatch vs bf16 reference"

    # Loose check vs. the exact f32 PyTorch-equivalent math (gap = bf16 MXU operands).
    ref_f32 = graphsage_reference_f32(node_features_list, params, num_neighbors_list)
    assert jnp.allclose(out, ref_f32, atol=1e-1, rtol=1e-1), "mismatch vs f32 reference"

    print("KERNEL_OK")
</pallas_src>

<mosaic_0001>
module attributes {stable_mosaic.version = 11 : i64} {
  func.func @_sage_gcn_kernel(%arg0: i32, %arg1: memref<16x128xbf16, #tpu.memory_space<vmem>>, %arg2: memref<16x512xbf16, #tpu.memory_space<vmem>>, %arg3: memref<640x128xbf16, #tpu.memory_space<vmem>>, %arg4: memref<16x128xbf16, #tpu.memory_space<vmem>>) attributes {dimension_semantics = [#tpu.dimension_semantics<parallel>], iteration_bounds = array<i64: 1>, scalar_prefetch = 0 : i64, scratch_operands = 0 : i64, tpu.core_type = #tpu.core_type<tc>, window_params = [{transform_indices = @transform_0, window_bounds = array<i64: 16, 128>}, {transform_indices = @transform_1, window_bounds = array<i64: 16, 512>}, {pipeline_mode = #tpu.pipeline_mode<synchronous>, transform_indices = @transform_2, window_bounds = array<i64: 640, 128>}, {transform_indices = @transform_3, window_bounds = array<i64: 16, 128>}]} {
    %c0 = arith.constant 0 : index
    %c0_0 = arith.constant 0 : index
    %0 = vector.load %arg1[%c0, %c0_0] : memref<16x128xbf16, #tpu.memory_space<vmem>>, vector<16x128xbf16>
    %c0_1 = arith.constant 0 : index
    %c0_2 = arith.constant 0 : index
    %1 = vector.load %arg2[%c0_1, %c0_2] : memref<16x512xbf16, #tpu.memory_space<vmem>>, vector<16x512xbf16>
    %c0_3 = arith.constant 0 : index
    %c0_4 = arith.constant 0 : index
    %2 = vector.load %arg3[%c0_3, %c0_4] : memref<640x128xbf16, #tpu.memory_space<vmem>>, vector<128x128xbf16>
    %cst = arith.constant dense<0.000000e+00> : vector<16x128xf32>
    %3 = tpu.matmul %0, %2, %cst {dimension_numbers = #tpu.dot_dimension_numbers<[1], [0], [0], [1], [0, 0, 1, 1], [], []>} : vector<16x128xbf16>, vector<128x128xbf16>, vector<16x128xf32> -> vector<16x128xf32>
    %c128 = arith.constant 128 : index
    %c0_5 = arith.constant 0 : index
    %4 = vector.load %arg3[%c128, %c0_5] : memref<640x128xbf16, #tpu.memory_space<vmem>>, vector<512x128xbf16>
    %cst_6 = arith.constant dense<0.000000e+00> : vector<16x128xf32>
    %5 = tpu.matmul %1, %4, %cst_6 {dimension_numbers = #tpu.dot_dimension_numbers<[1], [0], [0], [1], [0, 0, 1, 1], [], []>} : vector<16x512xbf16>, vector<512x128xbf16>, vector<16x128xf32> -> vector<16x128xf32>
    %6 = arith.addf %3, %5 : vector<16x128xf32>
    %cst_7 = arith.constant 0.000000e+00 : f32
    %7 = vector.broadcast %cst_7 : f32 to vector<16x128xf32>
    %8 = arith.maximumf %6, %7 : vector<16x128xf32>
    %9 = arith.truncf %8 : vector<16x128xf32> to vector<16x128xbf16>
    %c0_8 = arith.constant 0 : index
    %c0_9 = arith.constant 0 : index
    %10 = vector.load %arg4[%c0_8, %c0_9] : memref<16x128xbf16, #tpu.memory_space<vmem>>, vector<16x128xbf16>
    tpu.vector_store %arg4[%c0_8, %c0_9], %9 {strides = array<i32>} : memref<16x128xbf16, #tpu.memory_space<vmem>>, vector<16x128xbf16>,
    return
  }
  func.func @transform_0(%arg0: i32) -> (i32, i32) {
    %c0_i32 = arith.constant 0 : i32
    %c0_i32_0 = arith.constant 0 : i32
    return %arg0, %c0_i32 : i32, i32
  }
  func.func @transform_1(%arg0: i32) -> (i32, i32) {
    %c0_i32 = arith.constant 0 : i32
    %c0_i32_0 = arith.constant 0 : i32
    return %arg0, %c0_i32 : i32, i32
  }
  func.func @transform_2(%arg0: i32) -> (i32, i32) {
    %c0_i32 = arith.constant 0 : i32
    %c0_i32_0 = arith.constant 0 : i32
    %c0_i32_1 = arith.constant 0 : i32
    return %c0_i32, %c0_i32_0 : i32, i32
  }
  func.func @transform_3(%arg0: i32) -> (i32, i32) {
    %c0_i32 = arith.constant 0 : i32
    %c0_i32_0 = arith.constant 0 : i32
    return %arg0, %c0_i32 : i32, i32
  }
}

</mosaic_0001>

<llo_original>
// kernel: tpu_custom_call.1
$region0: #{tpu_custom_call.1}
  #allocation0 [shape = 'u32[]', space=smem, size = 0x4, offset = 0x4, fixed_abs, tag = 'smem constant byte address 0x4 - core index']
  #allocation1 [shape = 'u32[72,128]{1,0:T(1,128)}', space=vmem, size = 0x9000, scoped, tag = 'internal scratch']
  %s0 = inlined_call_operand.hbm [shape: bf16[16,128], index: 0, kind: input, shape index: {}]
  %s1 = inlined_call_operand.hbm [shape: bf16[16,512], index: 1, kind: input, shape index: {}]
  %s2 = inlined_call_operand.hbm [shape: bf16[640,128], index: 2, kind: input, shape index: {}]
  %s3 = inlined_call_operand.hbm [shape: bf16[16,128], index: 3, kind: output, shape index: {}]
  %s4 = sld [smem:[#allocation0]]
  $region34: #{tpu_custom_call.1} parent=0
    _
  %s6 = ssub.s32 1, %s4
  %s7 = scalar_select 0, %s6, %s4
  $region1: #{tpu_custom_call.1} parent=0
    #allocation2 [shape = 'u8[4096]{0}', space=vmem, size = 0x1000, scoped, tag = 'input window, operand 0, single buffered']
    #allocation3 [shape = 's32[1]{0}', space=sflag, size = 0x4, scoped, tag = 'scoped memory for tpu_custom_call.1']
    #allocation4 [shape = 's32[1]{0}', space=sflag, size = 0x4, scoped, tag = 'scoped memory for tpu_custom_call.1']
    #allocation5 [shape = 'u8[16384]{0}', space=vmem, size = 0x4000, scoped, tag = 'input window, operand 1, single buffered']
    #allocation6 [shape = 's32[1]{0}', space=sflag, size = 0x4, scoped, tag = 'scoped memory for tpu_custom_call.1']
    #allocation7 [shape = 'u8[163840]{0}', space=vmem, size = 0x28000, scoped, tag = 'input window, operand 2, single buffered']
    #allocation8 [shape = 'u8[4096]{0}', space=vmem, size = 0x1000, scoped, tag = 'output window, operand 0, single buffered']
    %8 = vsyncpa [#allocation3], 0
    %9 = vsyncpa [#allocation6], 0
    %10 = vsyncpa [#allocation4], 0
    // Predicated region
    $region2: #{tpu_custom_call.1} parent=1 // pred_check
      _
    $region3: #{tpu_custom_call.1} parent=1 // pred_check_branch
      %12 = sbr.rel (0) target = $region5
    $region4: #{tpu_custom_call.1} parent=1 // pred_region
      %14 = vsyncadd [#allocation3], 0
      %s15 = sshll.u32 %s0, 4
      %s16 = int_to_ptr.hbm [resolvable:$true] %s15
      %s17 = sshll.u32 [#allocation2], 4
      %s18 = int_to_ptr.vmem [resolvable:$true] %s17
      %23 = dma.hbm_to_vmem [thread:$0]  %s16, 128, %s18, [#allocation3], 64, 64, 4
    $region5: #{tpu_custom_call.1} parent=1 // pred_fallthru
      _
    // Predicated region
    $region6: #{tpu_custom_call.1} parent=1 // pred_check
      _
    $region7: #{tpu_custom_call.1} parent=1 // pred_check_branch
      %25 = sbr.rel (0) target = $region9
    $region8: #{tpu_custom_call.1} parent=1 // pred_region
      %27 = vsyncadd [#allocation6], 0
      %s28 = sshll.u32 %s1, 4
      %s29 = int_to_ptr.hbm [resolvable:$true] %s28
      %s30 = sshll.u32 [#allocation5], 4
      %s31 = int_to_ptr.vmem [resolvable:$true] %s30
      %36 = dma.hbm_to_vmem [thread:$0]  %s29, 512, %s31, [#allocation6], 256, 256, 16
    $region9: #{tpu_custom_call.1} parent=1 // pred_fallthru
      _
    // Predicated region
    $region10: #{tpu_custom_call.1} parent=1 // pred_check
      _
    $region11: #{tpu_custom_call.1} parent=1 // pred_check_branch
      %38 = sbr.rel (0) target = $region13
    $region12: #{tpu_custom_call.1} parent=1 // pred_region
      %40 = vsyncadd [#allocation6], 0
      %s41 = sshll.u32 %s2, 4
      %s42 = int_to_ptr.hbm [resolvable:$true] %s41
      %s43 = sshll.u32 [#allocation7], 4
      %s44 = int_to_ptr.vmem [resolvable:$true] %s43
      %49 = dma.hbm_to_vmem [thread:$0]  %s42, 5120, %s44, [#allocation6], 64, 64, 4
    $region13: #{tpu_custom_call.1} parent=1 // pred_fallthru
      _
    // Predicated region
    $region14: #{tpu_custom_call.1} parent=1 // pred_check
      _
    $region15: #{tpu_custom_call.1} parent=1 // pred_check_branch
      %51 = sbr.rel (0) target = $region17
    $region16: #{tpu_custom_call.1} parent=1 // pred_region
      %53 = dma.done [#allocation3], 128
    $region17: #{tpu_custom_call.1} parent=1 // pred_fallthru
      _
    // Predicated region
    $region18: #{tpu_custom_call.1} parent=1 // pred_check
      _
    $region19: #{tpu_custom_call.1} parent=1 // pred_check_branch
      %55 = sbr.rel (0) target = $region21
    $region20: #{tpu_custom_call.1} parent=1 // pred_region
      %57 = dma.done [#allocation6], 512
    $region21: #{tpu_custom_call.1} parent=1 // pred_fallthru
      _
    // Predicated region
    $region22: #{tpu_custom_call.1} parent=1 // pred_check
      _
    $region23: #{tpu_custom_call.1} parent=1 // pred_check_branch
      %59 = sbr.rel (0) target = $region25
    $region24: #{tpu_custom_call.1} parent=1 // pred_region
      %61 = dma.done [#allocation6], 5120
    $region25: #{tpu_custom_call.1} parent=1 // pred_fallthru
      _
    %v62 = vld [vmem:[#allocation2] sm:$0xf]
    %v63 = vld [vmem:[#allocation2 + $0x4] sm:$0xf]
    %v64 = vld [vmem:[#allocation5] sm:$0xff]
    %v65 = vld [vmem:[#allocation5 + $0x8] sm:$0xff]
    %v66 = vld [vmem:[#allocation5 + $0x10] sm:$0xff]
    %v67 = vld [vmem:[#allocation5 + $0x18] sm:$0xff]
    %v68 = vld [vmem:[#allocation7] sm:$0xf]
    %v69 = vld [vmem:[#allocation7 + $0x4] sm:$0xf]
    %v70 = vld [vmem:[#allocation7 + $0x8] sm:$0xf]
    %v71 = vld [vmem:[#allocation7 + $0xc] sm:$0xf]
    %v72 = vld [vmem:[#allocation7 + $0x10] sm:$0xf]
    %v73 = vld [vmem:[#allocation7 + $0x14] sm:$0xf]
    %v74 = vld [vmem:[#allocation7 + $0x18] sm:$0xf]
    %v75 = vld [vmem:[#allocation7 + $0x1c] sm:$0xf]
    %v76 = vld [vmem:[#allocation7 + $0x20] sm:$0xf]
    %v77 = vld [vmem:[#allocation7 + $0x24] sm:$0xf]
    %v78 = vld [vmem:[#allocation7 + $0x28] sm:$0xf]
    %v79 = vld [vmem:[#allocation7 + $0x2c] sm:$0xf]
    %v80 = vld [vmem:[#allocation7 + $0x30] sm:$0xf]
    %v81 = vld [vmem:[#allocation7 + $0x34] sm:$0xf]
    %v82 = vld [vmem:[#allocation7 + $0x38] sm:$0xf]
    %v83 = vld [vmem:[#allocation7 + $0x3c] sm:$0xf]
    %v84 = vld [vmem:[#allocation7 + $0x40] sm:$0xf]
    %v85 = vld [vmem:[#allocation7 + $0x44] sm:$0xf]
    %v86 = vld [vmem:[#allocation7 + $0x48] sm:$0xf]
    %v87 = vld [vmem:[#allocation7 + $0x4c] sm:$0xf]
    %v88 = vld [vmem:[#allocation7 + $0x50] sm:$0xf]
    %v89 = vld [vmem:[#allocation7 + $0x54] sm:$0xf]
    %v90 = vld [vmem:[#allocation7 + $0x58] sm:$0xf]
    %v91 = vld [vmem:[#allocation7 + $0x5c] sm:$0xf]
    %v92 = vld [vmem:[#allocation7 + $0x60] sm:$0xf]
    %v93 = vld [vmem:[#allocation7 + $0x64] sm:$0xf]
    %v94 = vld [vmem:[#allocation7 + $0x68] sm:$0xf]
    %v95 = vld [vmem:[#allocation7 + $0x6c] sm:$0xf]
    %v96 = vld [vmem:[#allocation7 + $0x70] sm:$0xf]
    %v97 = vld [vmem:[#allocation7 + $0x74] sm:$0xf]
    %v98 = vld [vmem:[#allocation7 + $0x78] sm:$0xf]
    %v99 = vld [vmem:[#allocation7 + $0x7c] sm:$0xf]
    %v100 = vld [vmem:[#allocation7 + $0x80] sm:$0xf]
    %v101 = vld [vmem:[#allocation7 + $0x84] sm:$0xf]
    %v102 = vld [vmem:[#allocation7 + $0x88] sm:$0xf]
    %v103 = vld [vmem:[#allocation7 + $0x8c] sm:$0xf]
    %v104 = vld [vmem:[#allocation7 + $0x90] sm:$0xf]
    %v105 = vld [vmem:[#allocation7 + $0x94] sm:$0xf]
    %v106 = vld [vmem:[#allocation7 + $0x98] sm:$0xf]
    %v107 = vld [vmem:[#allocation7 + $0x9c] sm:$0xf]
    %v108 = vld [vmem:[#allocation7 + $0xa0] sm:$0xf]
    %v109 = vld [vmem:[#allocation7 + $0xa4] sm:$0xf]
    %v110 = vld [vmem:[#allocation7 + $0xa8] sm:$0xf]
    %v111 = vld [vmem:[#allocation7 + $0xac] sm:$0xf]
    %v112 = vld [vmem:[#allocation7 + $0xb0] sm:$0xf]
    %v113 = vld [vmem:[#allocation7 + $0xb4] sm:$0xf]
    %v114 = vld [vmem:[#allocation7 + $0xb8] sm:$0xf]
    %v115 = vld [vmem:[#allocation7 + $0xbc] sm:$0xf]
    %v116 = vld [vmem:[#allocation7 + $0xc0] sm:$0xf]
    %v117 = vld [vmem:[#allocation7 + $0xc4] sm:$0xf]
    %v118 = vld [vmem:[#allocation7 + $0xc8] sm:$0xf]
    %v119 = vld [vmem:[#allocation7 + $0xcc] sm:$0xf]
    %v120 = vld [vmem:[#allocation7 + $0xd0] sm:$0xf]
    %v121 = vld [vmem:[#allocation7 + $0xd4] sm:$0xf]
    %v122 = vld [vmem:[#allocation7 + $0xd8] sm:$0xf]
    %v123 = vld [vmem:[#allocation7 + $0xdc] sm:$0xf]
    %v124 = vld [vmem:[#allocation7 + $0xe0] sm:$0xf]
    %v125 = vld [vmem:[#allocation7 + $0xe4] sm:$0xf]
    %v126 = vld [vmem:[#allocation7 + $0xe8] sm:$0xf]
    %v127 = vld [vmem:[#allocation7 + $0xec] sm:$0xf]
    %v128 = vld [vmem:[#allocation7 + $0xf0] sm:$0xf]
    %v129 = vld [vmem:[#allocation7 + $0xf4] sm:$0xf]
    %v130 = vld [vmem:[#allocation7 + $0xf8] sm:$0xf]
    %v131 = vld [vmem:[#allocation7 + $0xfc] sm:$0xf]
    %v132 = vld [vmem:[#allocation7 + $0x100] sm:$0xf]
    %v133 = vld [vmem:[#allocation7 + $0x104] sm:$0xf]
    %v134 = vld [vmem:[#allocation7 + $0x108] sm:$0xf]
    %v135 = vld [vmem:[#allocation7 + $0x10c] sm:$0xf]
    %v136 = vld [vmem:[#allocation7 + $0x110] sm:$0xf]
    %v137 = vld [vmem:[#allocation7 + $0x114] sm:$0xf]
    %v138 = vld [vmem:[#allocation7 + $0x118] sm:$0xf]
    %v139 = vld [vmem:[#allocation7 + $0x11c] sm:$0xf]
    %v140 = vld [vmem:[#allocation7 + $0x120] sm:$0xf]
    %v141 = vld [vmem:[#allocation7 + $0x124] sm:$0xf]
    %v142 = vld [vmem:[#allocation7 + $0x128] sm:$0xf]
    %v143 = vld [vmem:[#allocation7 + $0x12c] sm:$0xf]
    %v144 = vld [vmem:[#allocation7 + $0x130] sm:$0xf]
    %v145 = vld [vmem:[#allocation7 + $0x134] sm:$0xf]
    %v146 = vld [vmem:[#allocation7 + $0x138] sm:$0xf]
    %v147 = vld [vmem:[#allocation7 + $0x13c] sm:$0xf]
    %v152 = vunpack.c.l.b16 %v64
    %v153 = vunpack.c.h.b16 %v64
    %v154 = vunpack.c.l.b16 %v65
    %v155 = vunpack.c.h.b16 %v65
    %v156 = vunpack.c.l.b16 %v66
    %v157 = vunpack.c.h.b16 %v66
    %v158 = vunpack.c.l.b16 %v67
    %v159 = vunpack.c.h.b16 %v67
    %v160 = vpack.c.b16 %v156, %v152
    %v161 = vpack.c.b16 %v157, %v153
    %v162 = vpack.c.b16 %v158, %v154
    %v163 = vpack.c.b16 %v159, %v155
    %v232 = vunpack.c.l.b16 %v84
    %v233 = vunpack.c.l.b16 %v85
    %v234 = vunpack.c.l.b16 %v86
    %v235 = vunpack.c.l.b16 %v87
    %v236 = vunpack.c.l.b16 %v88
    %v237 = vunpack.c.l.b16 %v89
    %v238 = vunpack.c.l.b16 %v90
    %v239 = vunpack.c.l.b16 %v91
    %v240 = vunpack.c.l.b16 %v92
    %v241 = vunpack.c.l.b16 %v93
    %v242 = vunpack.c.l.b16 %v94
    %v243 = vunpack.c.l.b16 %v95
    %v244 = vunpack.c.l.b16 %v96
    %v245 = vunpack.c.l.b16 %v97
    %v246 = vunpack.c.l.b16 %v98
    %v247 = vunpack.c.l.b16 %v99
    %v248 = vunpack.c.l.b16 %v100
    %v249 = vunpack.c.l.b16 %v101
    %v250 = vunpack.c.l.b16 %v102
    %v251 = vunpack.c.l.b16 %v103
    %v252 = vunpack.c.l.b16 %v104
    %v253 = vunpack.c.l.b16 %v105
    %v254 = vunpack.c.l.b16 %v106
    %v255 = vunpack.c.l.b16 %v107
    %v256 = vunpack.c.l.b16 %v108
    %v257 = vunpack.c.l.b16 %v109
    %v258 = vunpack.c.l.b16 %v110
    %v259 = vunpack.c.l.b16 %v111
    %v260 = vunpack.c.l.b16 %v112
    %v261 = vunpack.c.l.b16 %v113
    %v262 = vunpack.c.l.b16 %v114
    %v263 = vunpack.c.l.b16 %v115
    %v264 = vunpack.c.l.b16 %v116
    %v265 = vunpack.c.l.b16 %v117
    %v266 = vunpack.c.l.b16 %v118
    %v267 = vunpack.c.l.b16 %v119
    %v268 = vunpack.c.l.b16 %v120
    %v269 = vunpack.c.l.b16 %v121
    %v270 = vunpack.c.l.b16 %v122
    %v271 = vunpack.c.l.b16 %v123
    %v272 = vunpack.c.l.b16 %v124
    %v273 = vunpack.c.l.b16 %v125
    %v274 = vunpack.c.l.b16 %v126
    %v275 = vunpack.c.l.b16 %v127
    %v276 = vunpack.c.l.b16 %v128
    %v277 = vunpack.c.l.b16 %v129
    %v278 = vunpack.c.l.b16 %v130
    %v279 = vunpack.c.l.b16 %v131
    %v280 = vunpack.c.l.b16 %v132
    %v281 = vunpack.c.l.b16 %v133
    %v282 = vunpack.c.l.b16 %v134
    %v283 = vunpack.c.l.b16 %v135
    %v284 = vunpack.c.l.b16 %v136
    %v285 = vunpack.c.l.b16 %v137
    %v286 = vunpack.c.l.b16 %v138
    %v287 = vunpack.c.l.b16 %v139
    %v288 = vunpack.c.l.b16 %v140
    %v289 = vunpack.c.l.b16 %v141
    %v290 = vunpack.c.l.b16 %v142
    %v291 = vunpack.c.l.b16 %v143
    %v292 = vunpack.c.l.b16 %v144
    %v293 = vunpack.c.l.b16 %v145
    %v294 = vunpack.c.l.b16 %v146
    %v295 = vunpack.c.l.b16 %v147
    %v296 = vpack.c.b16 %v233, %v232
    %v297 = vpack.c.b16 %v235, %v234
    %v298 = vpack.c.b16 %v237, %v236
    %v299 = vpack.c.b16 %v239, %v238
    %v300 = vpack.c.b16 %v241, %v240
    %v301 = vpack.c.b16 %v243, %v242
    %v302 = vpack.c.b16 %v245, %v244
    %v303 = vpack.c.b16 %v247, %v246
    %v304 = vpack.c.b16 %v249, %v248
    %v305 = vpack.c.b16 %v251, %v250
    %v306 = vpack.c.b16 %v253, %v252
    %v307 = vpack.c.b16 %v255, %v254
    %v308 = vpack.c.b16 %v257, %v256
    %v309 = vpack.c.b16 %v259, %v258
    %v310 = vpack.c.b16 %v261, %v260
    %v311 = vpack.c.b16 %v263, %v262
    %v312 = vpack.c.b16 %v265, %v264
    %v313 = vpack.c.b16 %v267, %v266
    %v314 = vpack.c.b16 %v269, %v268
    %v315 = vpack.c.b16 %v271, %v270
    %v316 = vpack.c.b16 %v273, %v272
    %v317 = vpack.c.b16 %v275, %v274
    %v318 = vpack.c.b16 %v277, %v276
    %v319 = vpack.c.b16 %v279, %v278
    %v320 = vpack.c.b16 %v281, %v280
    %v321 = vpack.c.b16 %v283, %v282
    %v322 = vpack.c.b16 %v285, %v284
    %v323 = vpack.c.b16 %v287, %v286
    %v324 = vpack.c.b16 %v289, %v288
    %v325 = vpack.c.b16 %v291, %v290
    %v326 = vpack.c.b16 %v293, %v292
    %v327 = vpack.c.b16 %v295, %v294
    %360 = vmatpush.bf16.msra.mxu0 %v303
    %361 = vmatpush.bf16.msra.mxu0 %v302
    %362 = vmatpush.bf16.msra.mxu0 %v301
    %363 = vmatpush.bf16.msra.mxu0 %v300
    %364 = vmatpush.bf16.msra.mxu0 %v299
    %365 = vmatpush.bf16.msra.mxu0 %v298
    %366 = vmatpush.bf16.msra.mxu0 %v297
    %367 = vmatpush.bf16.msra.mxu0 %v296
    %368 = vmatmul.bf16.gmra.mxu0 %v160
    %v369 = vpop.f32.mrf.mxu0
    %v370 = vadd.f32 0.0, %v369
    %v371 = vpop.f32.mrf.mxu0
    %v372 = vadd.f32 0.0, %v371
    %373 = vdwg.mxu0
    %374 = vmatpush.bf16.msra.mxu0 %v311
    %375 = vmatpush.bf16.msra.mxu0 %v310
    %376 = vmatpush.bf16.msra.mxu0 %v309
    %377 = vmatpush.bf16.msra.mxu0 %v308
    %378 = vmatpush.bf16.msra.mxu0 %v307
    %379 = vmatpush.bf16.msra.mxu0 %v306
    %380 = vmatpush.bf16.msra.mxu0 %v305
    %381 = vmatpush.bf16.msra.mxu0 %v304
    %382 = vmatmul.bf16.gmra.mxu0 %v161
    %v383 = vpop.f32.mrf.mxu0
    %v384 = vadd.f32 %v370, %v383
    %v385 = vpop.f32.mrf.mxu0
    %v386 = vadd.f32 %v372, %v385
    %387 = vdwg.mxu0
    %388 = vmatpush.bf16.msra.mxu0 %v319
    %389 = vmatpush.bf16.msra.mxu0 %v318
    %390 = vmatpush.bf16.msra.mxu0 %v317
    %391 = vmatpush.bf16.msra.mxu0 %v316
    %392 = vmatpush.bf16.msra.mxu0 %v315
    %393 = vmatpush.bf16.msra.mxu0 %v314
    %394 = vmatpush.bf16.msra.mxu0 %v313
    %395 = vmatpush.bf16.msra.mxu0 %v312
    %396 = vmatmul.bf16.gmra.mxu0 %v162
    %v397 = vpop.f32.mrf.mxu0
    %v398 = vadd.f32 %v384, %v397
    %v399 = vpop.f32.mrf.mxu0
    %v400 = vadd.f32 %v386, %v399
    %401 = vdwg.mxu0
    %402 = vmatpush.bf16.msra.mxu0 %v327
    %403 = vmatpush.bf16.msra.mxu0 %v326
    %404 = vmatpush.bf16.msra.mxu0 %v325
    %405 = vmatpush.bf16.msra.mxu0 %v324
    %406 = vmatpush.bf16.msra.mxu0 %v323
    %407 = vmatpush.bf16.msra.mxu0 %v322
    %408 = vmatpush.bf16.msra.mxu0 %v321
    %409 = vmatpush.bf16.msra.mxu0 %v320
    %410 = vmatmul.bf16.gmra.mxu0 %v163
    %v411 = vpop.f32.mrf.mxu0
    %v412 = vadd.f32 %v398, %v411
    %v413 = vpop.f32.mrf.mxu0
    %v414 = vadd.f32 %v400, %v413
    %415 = vdwg.mxu0
    %v418 = vunpack.c.l.b16 %v62
    %v419 = vunpack.c.l.b16 %v63
    %v420 = vpack.c.b16 %v419, %v418
    %v438 = vunpack.c.l.b16 %v68
    %v439 = vunpack.c.l.b16 %v69
    %v440 = vunpack.c.l.b16 %v70
    %v441 = vunpack.c.l.b16 %v71
    %v442 = vunpack.c.l.b16 %v72
    %v443 = vunpack.c.l.b16 %v73
    %v444 = vunpack.c.l.b16 %v74
    %v445 = vunpack.c.l.b16 %v75
    %v446 = vunpack.c.l.b16 %v76
    %v447 = vunpack.c.l.b16 %v77
    %v448 = vunpack.c.l.b16 %v78
    %v449 = vunpack.c.l.b16 %v79
    %v450 = vunpack.c.l.b16 %v80
    %v451 = vunpack.c.l.b16 %v81
    %v452 = vunpack.c.l.b16 %v82
    %v453 = vunpack.c.l.b16 %v83
    %v454 = vpack.c.b16 %v439, %v438
    %v455 = vpack.c.b16 %v441, %v440
    %v456 = vpack.c.b16 %v443, %v442
    %v457 = vpack.c.b16 %v445, %v444
    %v458 = vpack.c.b16 %v447, %v446
    %v459 = vpack.c.b16 %v449, %v448
    %v460 = vpack.c.b16 %v451, %v450
    %v461 = vpack.c.b16 %v453, %v452
    %470 = vmatpush.bf16.msra.mxu0 %v461
    %471 = vmatpush.bf16.msra.mxu0 %v460
    %472 = vmatpush.bf16.msra.mxu0 %v459
    %473 = vmatpush.bf16.msra.mxu0 %v458
    %474 = vmatpush.bf16.msra.mxu0 %v457
    %475 = vmatpush.bf16.msra.mxu0 %v456
    %476 = vmatpush.bf16.msra.mxu0 %v455
    %477 = vmatpush.bf16.msra.mxu0 %v454
    %478 = vmatmul.bf16.gmra.mxu0 %v420
    %v479 = vpop.f32.mrf.mxu0
    %v480 = vadd.f32 %v412, %v479
    %v481 = vpop.f32.mrf.mxu0
    %v482 = vadd.f32 %v414, %v481
    %483 = vdwg.mxu0
    %v484 = vmax.f32 %v480, 0.0
    %v485 = vmax.f32 %v482, 0.0
    %v486 = vpack.c.bf16 %v484, %v484
    %v487 = vpack.c.bf16 %v485, %v485
    %488 = vst [vmem:[#allocation8] sm:$0xf] %v486
    %489 = vst [vmem:[#allocation8 + $0x4] sm:$0xf] %v487
    // Predicated region
    $region26: #{tpu_custom_call.1} parent=1 // pred_check
      _
    $region27: #{tpu_custom_call.1} parent=1 // pred_check_branch
      %491 = sbr.rel (0) target = $region29
    $region28: #{tpu_custom_call.1} parent=1 // pred_region
      %493 = vsyncadd [#allocation4], 0
      %s494 = sshll.u32 [#allocation8], 4
      %s495 = int_to_ptr.vmem [resolvable:$true] %s494
      %s496 = sshll.u32 %s3, 4
      %s497 = int_to_ptr.hbm [resolvable:$true] %s496
      %502 = dma.vmem_to_hbm [thread:$0]  %s495, 128, %s497, [#allocation4], 64, 64, 4
    $region29: #{tpu_custom_call.1} parent=1 // pred_fallthru
      _
    // Predicated region
    $region30: #{tpu_custom_call.1} parent=1 // pred_check
      _
    $region31: #{tpu_custom_call.1} parent=1 // pred_check_branch
      %504 = sbr.rel (0) target = $region33
    $region32: #{tpu_custom_call.1} parent=1 // pred_region
      %506 = dma.done [#allocation4], 128
    $region33: #{tpu_custom_call.1} parent=1 // pred_fallthru
      _
    %507 = vsyncpa [#allocation3], 1
    %508 = vsyncpa [#allocation6], 1
    %509 = vsyncpa [#allocation4], 1

</llo_original>
